<compile_context>
chip_gen: v7x
topology: tpu7x:2x2x1
jax: 0.10.0
libtpu: 0.0.40
codegen_flags: <defaults>
</compile_context>

<pallas_src>
import jax
import jax.numpy as jnp
from jax.experimental import pallas as pl
from jax.experimental.pallas import tpu as pltpu

# ---------------- module hyper-parameters (from GBDTLR.__init__ defaults) ----
NUM_LEAVES = 31
N_ESTIMATORS = 100
FEAT_DIM = NUM_LEAVES * N_ESTIMATORS  # 3100 = LR input dimension
OBJECTIVE = "binary"                  # -> sigmoid output


def _round_up(x, m):
    return (x + m - 1) // m * m


# ------------------------------- Pallas kernel -------------------------------
def lr_leaf_kernel(idx_ref, w_ref, b_ref, o_ref):
    """sigmoid( sum_t W[leaf_idx[b,t], t] + bias ) for one batch block.

    idx_ref : [Bt, Tp] int32  leaf index per (row, tree); padding = -1
    w_ref   : [Lp, Tp] f32    LR weights, W[l, t] = lr_w[t*NUM_LEAVES + l]
    b_ref   : [1]      f32    bias (SMEM scalar)
    o_ref   : [Bt, 1]  f32    sigmoid output
    """
    idx = idx_ref[...]                      # [Bt, Tp] int32
    w = w_ref[...]                          # [Lp, Tp] f32 (resident)
    acc = jnp.zeros(idx.shape, jnp.float32)
    # Select-accumulate: 31 unrolled VPU compare/select/add steps.  Padded
    # lanes / rows carry index -1, never match, and contribute zero.
    for leaf in range(NUM_LEAVES):
        acc += jnp.where(idx == leaf, w[leaf:leaf + 1, :], 0.0)
    z = jnp.sum(acc, axis=-1, keepdims=True) + b_ref[0]   # lane reduce (XLU)
    o_ref[...] = jax.nn.sigmoid(z).astype(o_ref.dtype)


def logistic_over_leaves_pallas(leaf_idx, lr_w, lr_b, *, block_b=256):
    """leaf_idx: [B, T] int32, lr_w: [T*L, 1] f32, lr_b: [1] f32 -> [B, 1]."""
    B, T = leaf_idx.shape
    L = NUM_LEAVES
    assert T * L == lr_w.shape[0]

    Tp = _round_up(max(T, 128), 128)        # trees  -> lanes   (100 -> 128)
    Lp = _round_up(L, 8)                    # leaves -> sublanes (31 -> 32)
    Bt = min(block_b, _round_up(B, 8))      # batch block; 1 grid step if small
    Bp = _round_up(B, Bt)

    # Tiny padded copies (indices are ~400 B/row vs 12.4 KB/row of one-hot).
    idx_p = jnp.pad(leaf_idx.astype(jnp.int32),
                    ((0, Bp - B), (0, Tp - T)), constant_values=-1)
    w_lt = jnp.pad(lr_w.reshape(T, L).T.astype(jnp.float32),
                   ((0, Lp - L), (0, Tp - T)))
    b = lr_b.reshape(1).astype(jnp.float32)

    out = pl.pallas_call(
        lr_leaf_kernel,
        out_shape=jax.ShapeDtypeStruct((Bp, 1), jnp.float32),
        grid_spec=pltpu.PrefetchScalarGridSpec(
            num_scalar_prefetch=0,
            grid=(Bp // Bt,),
            in_specs=[
                pl.BlockSpec((Bt, Tp), lambda i: (i, 0)),            # indices
                pl.BlockSpec((Lp, Tp), lambda i: (0, 0)),            # weights
                pl.BlockSpec(memory_space=pltpu.MemorySpace.SMEM),   # bias
            ],
            out_specs=pl.BlockSpec((Bt, 1), lambda i: (i, 0)),
        ),
        compiler_params=pltpu.CompilerParams(
            dimension_semantics=("parallel",),   # megacore-shardable (v7x)
        ),
    )(idx_p, w_lt, b)

    return out[:B, :]


# ----------------------- GBDT pred surrogate (plain JAX glue) ----------------
def gbdt_leaf_indices_surrogate(data, proj):
    """Deterministic stand-in for `self.gbdt.pred(data)` leaf assignment."""
    # TODO(synk): real LightGBM tree traversal (data-dependent branching over
    # learned splits) has no Pallas equivalent; a fixed projection + modulo is
    # used to produce a deterministic per-tree leaf index.
    scores = data @ proj                                      # [B, n_estimators]
    leaf_idx = (jnp.abs(scores * 997.0).astype(jnp.int32)) % NUM_LEAVES
    return leaf_idx                                           # [B, n_estimators]


# --------------------------------- GBDTLR forward ----------------------------
@jax.jit
def gbdt_lr_forward(data, proj, lr_w, lr_b):
    leaf_idx = gbdt_leaf_indices_surrogate(data, proj)        # GBDT part (glue)
    y = logistic_over_leaves_pallas(leaf_idx, lr_w, lr_b)     # LR part (Pallas)
    return y


if __name__ == "__main__":
    key = jax.random.PRNGKey(0)
    k_data, k_proj, k_w, k_b = jax.random.split(key, 4)

    B, F = 4, 16                                # small example input
    data = jax.random.normal(k_data, (B, F), dtype=jnp.float32)

    # deterministic parameter init
    proj = jax.random.normal(k_proj, (F, N_ESTIMATORS), dtype=jnp.float32)
    lr_w = jax.random.normal(k_w, (FEAT_DIM, 1), dtype=jnp.float32) * 0.02
    lr_b = jax.random.normal(k_b, (1,), dtype=jnp.float32) * 0.02

    y = gbdt_lr_forward(data, proj, lr_w, lr_b)
    y = jax.block_until_ready(y)

    # reference check (plain JAX): dense one-hot leaf features -> LR -> sigmoid
    leaf_idx = jax.jit(gbdt_leaf_indices_surrogate)(data, proj)
    feat_ref = jax.nn.one_hot(leaf_idx, NUM_LEAVES,
                              dtype=jnp.float32).reshape(B, FEAT_DIM)
    y_ref = jax.nn.sigmoid(feat_ref @ lr_w + lr_b)

    assert y.shape == (B, 1)
    assert jnp.allclose(y, y_ref, atol=1e-5, rtol=1e-5)

    print("KERNEL_OK")
</pallas_src>

<mosaic_0001>
module attributes {stable_mosaic.version = 11 : i64} {
  func.func @lr_leaf_kernel(%arg0: i32, %arg1: memref<8x128xi32, #tpu.memory_space<vmem>>, %arg2: memref<32x128xf32, #tpu.memory_space<vmem>>, %arg3: memref<1xf32, #tpu.memory_space<smem>>, %arg4: memref<8x1xf32, #tpu.memory_space<vmem>>) attributes {dimension_semantics = [#tpu.dimension_semantics<parallel>], iteration_bounds = array<i64: 1>, scalar_prefetch = 0 : i64, scratch_operands = 0 : i64, tpu.core_type = #tpu.core_type<tc>, window_params = [{transform_indices = @transform_0, window_bounds = array<i64: 8, 128>}, {pipeline_mode = #tpu.pipeline_mode<synchronous>, transform_indices = @transform_1, window_bounds = array<i64: 32, 128>}, {transform_indices = @transform_2, window_bounds = array<i64: 1>}, {transform_indices = @transform_3, window_bounds = array<i64: 8, 1>}]} {
    %c0 = arith.constant 0 : index
    %c0_0 = arith.constant 0 : index
    %0 = vector.load %arg1[%c0, %c0_0] : memref<8x128xi32, #tpu.memory_space<vmem>>, vector<8x128xi32>
    %c0_1 = arith.constant 0 : index
    %c0_2 = arith.constant 0 : index
    %1 = vector.load %arg2[%c0_1, %c0_2] : memref<32x128xf32, #tpu.memory_space<vmem>>, vector<32x128xf32>
    %cst = arith.constant 0.000000e+00 : f32
    %2 = vector.broadcast %cst : f32 to vector<8x128xf32>
    %c0_i32 = arith.constant 0 : i32
    %3 = vector.broadcast %c0_i32 : i32 to vector<8x128xi32>
    %4 = arith.cmpi eq, %0, %3 : vector<8x128xi32>
    %5 = vector.extract_strided_slice %1 {offsets = [0, 0], sizes = [1, 128], strides = [1, 1]} : vector<32x128xf32> to vector<1x128xf32>
    %cst_3 = arith.constant 0.000000e+00 : f32
    %6 = vector.shape_cast %5 : vector<1x128xf32> to vector<1x128xf32>
    %7 = vector.broadcast %6 : vector<1x128xf32> to vector<8x128xf32>
    %8 = vector.broadcast %cst_3 : f32 to vector<8x128xf32>
    %9 = arith.select %4, %7, %8 : vector<8x128xi1>, vector<8x128xf32>
    %10 = arith.addf %2, %9 : vector<8x128xf32>
    %c1_i32 = arith.constant 1 : i32
    %11 = vector.broadcast %c1_i32 : i32 to vector<8x128xi32>
    %12 = arith.cmpi eq, %0, %11 : vector<8x128xi32>
    %13 = vector.extract_strided_slice %1 {offsets = [1, 0], sizes = [1, 128], strides = [1, 1]} : vector<32x128xf32> to vector<1x128xf32>
    %cst_4 = arith.constant 0.000000e+00 : f32
    %14 = vector.shape_cast %13 : vector<1x128xf32> to vector<1x128xf32>
    %15 = vector.broadcast %14 : vector<1x128xf32> to vector<8x128xf32>
    %16 = vector.broadcast %cst_4 : f32 to vector<8x128xf32>
    %17 = arith.select %12, %15, %16 : vector<8x128xi1>, vector<8x128xf32>
    %18 = arith.addf %10, %17 : vector<8x128xf32>
    %c2_i32 = arith.constant 2 : i32
    %19 = vector.broadcast %c2_i32 : i32 to vector<8x128xi32>
    %20 = arith.cmpi eq, %0, %19 : vector<8x128xi32>
    %21 = vector.extract_strided_slice %1 {offsets = [2, 0], sizes = [1, 128], strides = [1, 1]} : vector<32x128xf32> to vector<1x128xf32>
    %cst_5 = arith.constant 0.000000e+00 : f32
    %22 = vector.shape_cast %21 : vector<1x128xf32> to vector<1x128xf32>
    %23 = vector.broadcast %22 : vector<1x128xf32> to vector<8x128xf32>
    %24 = vector.broadcast %cst_5 : f32 to vector<8x128xf32>
    %25 = arith.select %20, %23, %24 : vector<8x128xi1>, vector<8x128xf32>
    %26 = arith.addf %18, %25 : vector<8x128xf32>
    %c3_i32 = arith.constant 3 : i32
    %27 = vector.broadcast %c3_i32 : i32 to vector<8x128xi32>
    %28 = arith.cmpi eq, %0, %27 : vector<8x128xi32>
    %29 = vector.extract_strided_slice %1 {offsets = [3, 0], sizes = [1, 128], strides = [1, 1]} : vector<32x128xf32> to vector<1x128xf32>
    %cst_6 = arith.constant 0.000000e+00 : f32
    %30 = vector.shape_cast %29 : vector<1x128xf32> to vector<1x128xf32>
    %31 = vector.broadcast %30 : vector<1x128xf32> to vector<8x128xf32>
    %32 = vector.broadcast %cst_6 : f32 to vector<8x128xf32>
    %33 = arith.select %28, %31, %32 : vector<8x128xi1>, vector<8x128xf32>
    %34 = arith.addf %26, %33 : vector<8x128xf32>
    %c4_i32 = arith.constant 4 : i32
    %35 = vector.broadcast %c4_i32 : i32 to vector<8x128xi32>
    %36 = arith.cmpi eq, %0, %35 : vector<8x128xi32>
    %37 = vector.extract_strided_slice %1 {offsets = [4, 0], sizes = [1, 128], strides = [1, 1]} : vector<32x128xf32> to vector<1x128xf32>
    %cst_7 = arith.constant 0.000000e+00 : f32
    %38 = vector.shape_cast %37 : vector<1x128xf32> to vector<1x128xf32>
    %39 = vector.broadcast %38 : vector<1x128xf32> to vector<8x128xf32>
    %40 = vector.broadcast %cst_7 : f32 to vector<8x128xf32>
    %41 = arith.select %36, %39, %40 : vector<8x128xi1>, vector<8x128xf32>
    %42 = arith.addf %34, %41 : vector<8x128xf32>
    %c5_i32 = arith.constant 5 : i32
    %43 = vector.broadcast %c5_i32 : i32 to vector<8x128xi32>
    %44 = arith.cmpi eq, %0, %43 : vector<8x128xi32>
    %45 = vector.extract_strided_slice %1 {offsets = [5, 0], sizes = [1, 128], strides = [1, 1]} : vector<32x128xf32> to vector<1x128xf32>
    %cst_8 = arith.constant 0.000000e+00 : f32
    %46 = vector.shape_cast %45 : vector<1x128xf32> to vector<1x128xf32>
    %47 = vector.broadcast %46 : vector<1x128xf32> to vector<8x128xf32>
    %48 = vector.broadcast %cst_8 : f32 to vector<8x128xf32>
    %49 = arith.select %44, %47, %48 : vector<8x128xi1>, vector<8x128xf32>
    %50 = arith.addf %42, %49 : vector<8x128xf32>
    %c6_i32 = arith.constant 6 : i32
    %51 = vector.broadcast %c6_i32 : i32 to vector<8x128xi32>
    %52 = arith.cmpi eq, %0, %51 : vector<8x128xi32>
    %53 = vector.extract_strided_slice %1 {offsets = [6, 0], sizes = [1, 128], strides = [1, 1]} : vector<32x128xf32> to vector<1x128xf32>
    %cst_9 = arith.constant 0.000000e+00 : f32
    %54 = vector.shape_cast %53 : vector<1x128xf32> to vector<1x128xf32>
    %55 = vector.broadcast %54 : vector<1x128xf32> to vector<8x128xf32>
    %56 = vector.broadcast %cst_9 : f32 to vector<8x128xf32>
    %57 = arith.select %52, %55, %56 : vector<8x128xi1>, vector<8x128xf32>
    %58 = arith.addf %50, %57 : vector<8x128xf32>
    %c7_i32 = arith.constant 7 : i32
    %59 = vector.broadcast %c7_i32 : i32 to vector<8x128xi32>
    %60 = arith.cmpi eq, %0, %59 : vector<8x128xi32>
    %61 = vector.extract_strided_slice %1 {offsets = [7, 0], sizes = [1, 128], strides = [1, 1]} : vector<32x128xf32> to vector<1x128xf32>
    %cst_10 = arith.constant 0.000000e+00 : f32
    %62 = vector.shape_cast %61 : vector<1x128xf32> to vector<1x128xf32>
    %63 = vector.broadcast %62 : vector<1x128xf32> to vector<8x128xf32>
    %64 = vector.broadcast %cst_10 : f32 to vector<8x128xf32>
    %65 = arith.select %60, %63, %64 : vector<8x128xi1>, vector<8x128xf32>
    %66 = arith.addf %58, %65 : vector<8x128xf32>
    %c8_i32 = arith.constant 8 : i32
    %67 = vector.broadcast %c8_i32 : i32 to vector<8x128xi32>
    %68 = arith.cmpi eq, %0, %67 : vector<8x128xi32>
    %69 = vector.extract_strided_slice %1 {offsets = [8, 0], sizes = [1, 128], strides = [1, 1]} : vector<32x128xf32> to vector<1x128xf32>
    %cst_11 = arith.constant 0.000000e+00 : f32
    %70 = vector.shape_cast %69 : vector<1x128xf32> to vector<1x128xf32>
    %71 = vector.broadcast %70 : vector<1x128xf32> to vector<8x128xf32>
    %72 = vector.broadcast %cst_11 : f32 to vector<8x128xf32>
    %73 = arith.select %68, %71, %72 : vector<8x128xi1>, vector<8x128xf32>
    %74 = arith.addf %66, %73 : vector<8x128xf32>
    %c9_i32 = arith.constant 9 : i32
    %75 = vector.broadcast %c9_i32 : i32 to vector<8x128xi32>
    %76 = arith.cmpi eq, %0, %75 : vector<8x128xi32>
    %77 = vector.extract_strided_slice %1 {offsets = [9, 0], sizes = [1, 128], strides = [1, 1]} : vector<32x128xf32> to vector<1x128xf32>
    %cst_12 = arith.constant 0.000000e+00 : f32
    %78 = vector.shape_cast %77 : vector<1x128xf32> to vector<1x128xf32>
    %79 = vector.broadcast %78 : vector<1x128xf32> to vector<8x128xf32>
    %80 = vector.broadcast %cst_12 : f32 to vector<8x128xf32>
    %81 = arith.select %76, %79, %80 : vector<8x128xi1>, vector<8x128xf32>
    %82 = arith.addf %74, %81 : vector<8x128xf32>
    %c10_i32 = arith.constant 10 : i32
    %83 = vector.broadcast %c10_i32 : i32 to vector<8x128xi32>
    %84 = arith.cmpi eq, %0, %83 : vector<8x128xi32>
    %85 = vector.extract_strided_slice %1 {offsets = [10, 0], sizes = [1, 128], strides = [1, 1]} : vector<32x128xf32> to vector<1x128xf32>
    %cst_13 = arith.constant 0.000000e+00 : f32
    %86 = vector.shape_cast %85 : vector<1x128xf32> to vector<1x128xf32>
    %87 = vector.broadcast %86 : vector<1x128xf32> to vector<8x128xf32>
    %88 = vector.broadcast %cst_13 : f32 to vector<8x128xf32>
    %89 = arith.select %84, %87, %88 : vector<8x128xi1>, vector<8x128xf32>
    %90 = arith.addf %82, %89 : vector<8x128xf32>
    %c11_i32 = arith.constant 11 : i32
    %91 = vector.broadcast %c11_i32 : i32 to vector<8x128xi32>
    %92 = arith.cmpi eq, %0, %91 : vector<8x128xi32>
    %93 = vector.extract_strided_slice %1 {offsets = [11, 0], sizes = [1, 128], strides = [1, 1]} : vector<32x128xf32> to vector<1x128xf32>
    %cst_14 = arith.constant 0.000000e+00 : f32
    %94 = vector.shape_cast %93 : vector<1x128xf32> to vector<1x128xf32>
    %95 = vector.broadcast %94 : vector<1x128xf32> to vector<8x128xf32>
    %96 = vector.broadcast %cst_14 : f32 to vector<8x128xf32>
    %97 = arith.select %92, %95, %96 : vector<8x128xi1>, vector<8x128xf32>
    %98 = arith.addf %90, %97 : vector<8x128xf32>
    %c12_i32 = arith.constant 12 : i32
    %99 = vector.broadcast %c12_i32 : i32 to vector<8x128xi32>
    %100 = arith.cmpi eq, %0, %99 : vector<8x128xi32>
    %101 = vector.extract_strided_slice %1 {offsets = [12, 0], sizes = [1, 128], strides = [1, 1]} : vector<32x128xf32> to vector<1x128xf32>
    %cst_15 = arith.constant 0.000000e+00 : f32
    %102 = vector.shape_cast %101 : vector<1x128xf32> to vector<1x128xf32>
    %103 = vector.broadcast %102 : vector<1x128xf32> to vector<8x128xf32>
    %104 = vector.broadcast %cst_15 : f32 to vector<8x128xf32>
    %105 = arith.select %100, %103, %104 : vector<8x128xi1>, vector<8x128xf32>
    %106 = arith.addf %98, %105 : vector<8x128xf32>
    %c13_i32 = arith.constant 13 : i32
    %107 = vector.broadcast %c13_i32 : i32 to vector<8x128xi32>
    %108 = arith.cmpi eq, %0, %107 : vector<8x128xi32>
    %109 = vector.extract_strided_slice %1 {offsets = [13, 0], sizes = [1, 128], strides = [1, 1]} : vector<32x128xf32> to vector<1x128xf32>
    %cst_16 = arith.constant 0.000000e+00 : f32
    %110 = vector.shape_cast %109 : vector<1x128xf32> to vector<1x128xf32>
    %111 = vector.broadcast %110 : vector<1x128xf32> to vector<8x128xf32>
    %112 = vector.broadcast %cst_16 : f32 to vector<8x128xf32>
    %113 = arith.select %108, %111, %112 : vector<8x128xi1>, vector<8x128xf32>
    %114 = arith.addf %106, %113 : vector<8x128xf32>
    %c14_i32 = arith.constant 14 : i32
    %115 = vector.broadcast %c14_i32 : i32 to vector<8x128xi32>
    %116 = arith.cmpi eq, %0, %115 : vector<8x128xi32>
    %117 = vector.extract_strided_slice %1 {offsets = [14, 0], sizes = [1, 128], strides = [1, 1]} : vector<32x128xf32> to vector<1x128xf32>
    %cst_17 = arith.constant 0.000000e+00 : f32
    %118 = vector.shape_cast %117 : vector<1x128xf32> to vector<1x128xf32>
    %119 = vector.broadcast %118 : vector<1x128xf32> to vector<8x128xf32>
    %120 = vector.broadcast %cst_17 : f32 to vector<8x128xf32>
    %121 = arith.select %116, %119, %120 : vector<8x128xi1>, vector<8x128xf32>
    %122 = arith.addf %114, %121 : vector<8x128xf32>
    %c15_i32 = arith.constant 15 : i32
    %123 = vector.broadcast %c15_i32 : i32 to vector<8x128xi32>
    %124 = arith.cmpi eq, %0, %123 : vector<8x128xi32>
    %125 = vector.extract_strided_slice %1 {offsets = [15, 0], sizes = [1, 128], strides = [1, 1]} : vector<32x128xf32> to vector<1x128xf32>
    %cst_18 = arith.constant 0.000000e+00 : f32
    %126 = vector.shape_cast %125 : vector<1x128xf32> to vector<1x128xf32>
    %127 = vector.broadcast %126 : vector<1x128xf32> to vector<8x128xf32>
    %128 = vector.broadcast %cst_18 : f32 to vector<8x128xf32>
    %129 = arith.select %124, %127, %128 : vector<8x128xi1>, vector<8x128xf32>
    %130 = arith.addf %122, %129 : vector<8x128xf32>
    %c16_i32 = arith.constant 16 : i32
    %131 = vector.broadcast %c16_i32 : i32 to vector<8x128xi32>
    %132 = arith.cmpi eq, %0, %131 : vector<8x128xi32>
    %133 = vector.extract_strided_slice %1 {offsets = [16, 0], sizes = [1, 128], strides = [1, 1]} : vector<32x128xf32> to vector<1x128xf32>
    %cst_19 = arith.constant 0.000000e+00 : f32
    %134 = vector.shape_cast %133 : vector<1x128xf32> to vector<1x128xf32>
    %135 = vector.broadcast %134 : vector<1x128xf32> to vector<8x128xf32>
    %136 = vector.broadcast %cst_19 : f32 to vector<8x128xf32>
    %137 = arith.select %132, %135, %136 : vector<8x128xi1>, vector<8x128xf32>
    %138 = arith.addf %130, %137 : vector<8x128xf32>
    %c17_i32 = arith.constant 17 : i32
    %139 = vector.broadcast %c17_i32 : i32 to vector<8x128xi32>
    %140 = arith.cmpi eq, %0, %139 : vector<8x128xi32>
    %141 = vector.extract_strided_slice %1 {offsets = [17, 0], sizes = [1, 128], strides = [1, 1]} : vector<32x128xf32> to vector<1x128xf32>
    %cst_20 = arith.constant 0.000000e+00 : f32
    %142 = vector.shape_cast %141 : vector<1x128xf32> to vector<1x128xf32>
    %143 = vector.broadcast %142 : vector<1x128xf32> to vector<8x128xf32>
    %144 = vector.broadcast %cst_20 : f32 to vector<8x128xf32>
    %145 = arith.select %140, %143, %144 : vector<8x128xi1>, vector<8x128xf32>
    %146 = arith.addf %138, %145 : vector<8x128xf32>
    %c18_i32 = arith.constant 18 : i32
    %147 = vector.broadcast %c18_i32 : i32 to vector<8x128xi32>
    %148 = arith.cmpi eq, %0, %147 : vector<8x128xi32>
    %149 = vector.extract_strided_slice %1 {offsets = [18, 0], sizes = [1, 128], strides = [1, 1]} : vector<32x128xf32> to vector<1x128xf32>
    %cst_21 = arith.constant 0.000000e+00 : f32
    %150 = vector.shape_cast %149 : vector<1x128xf32> to vector<1x128xf32>
    %151 = vector.broadcast %150 : vector<1x128xf32> to vector<8x128xf32>
    %152 = vector.broadcast %cst_21 : f32 to vector<8x128xf32>
    %153 = arith.select %148, %151, %152 : vector<8x128xi1>, vector<8x128xf32>
    %154 = arith.addf %146, %153 : vector<8x128xf32>
    %c19_i32 = arith.constant 19 : i32
    %155 = vector.broadcast %c19_i32 : i32 to vector<8x128xi32>
    %156 = arith.cmpi eq, %0, %155 : vector<8x128xi32>
    %157 = vector.extract_strided_slice %1 {offsets = [19, 0], sizes = [1, 128], strides = [1, 1]} : vector<32x128xf32> to vector<1x128xf32>
    %cst_22 = arith.constant 0.000000e+00 : f32
    %158 = vector.shape_cast %157 : vector<1x128xf32> to vector<1x128xf32>
    %159 = vector.broadcast %158 : vector<1x128xf32> to vector<8x128xf32>
    %160 = vector.broadcast %cst_22 : f32 to vector<8x128xf32>
    %161 = arith.select %156, %159, %160 : vector<8x128xi1>, vector<8x128xf32>
    %162 = arith.addf %154, %161 : vector<8x128xf32>
    %c20_i32 = arith.constant 20 : i32
    %163 = vector.broadcast %c20_i32 : i32 to vector<8x128xi32>
    %164 = arith.cmpi eq, %0, %163 : vector<8x128xi32>
    %165 = vector.extract_strided_slice %1 {offsets = [20, 0], sizes = [1, 128], strides = [1, 1]} : vector<32x128xf32> to vector<1x128xf32>
    %cst_23 = arith.constant 0.000000e+00 : f32
    %166 = vector.shape_cast %165 : vector<1x128xf32> to vector<1x128xf32>
    %167 = vector.broadcast %166 : vector<1x128xf32> to vector<8x128xf32>
    %168 = vector.broadcast %cst_23 : f32 to vector<8x128xf32>
    %169 = arith.select %164, %167, %168 : vector<8x128xi1>, vector<8x128xf32>
    %170 = arith.addf %162, %169 : vector<8x128xf32>
    %c21_i32 = arith.constant 21 : i32
    %171 = vector.broadcast %c21_i32 : i32 to vector<8x128xi32>
    %172 = arith.cmpi eq, %0, %171 : vector<8x128xi32>
    %173 = vector.extract_strided_slice %1 {offsets = [21, 0], sizes = [1, 128], strides = [1, 1]} : vector<32x128xf32> to vector<1x128xf32>
    %cst_24 = arith.constant 0.000000e+00 : f32
    %174 = vector.shape_cast %173 : vector<1x128xf32> to vector<1x128xf32>
    %175 = vector.broadcast %174 : vector<1x128xf32> to vector<8x128xf32>
    %176 = vector.broadcast %cst_24 : f32 to vector<8x128xf32>
    %177 = arith.select %172, %175, %176 : vector<8x128xi1>, vector<8x128xf32>
    %178 = arith.addf %170, %177 : vector<8x128xf32>
    %c22_i32 = arith.constant 22 : i32
    %179 = vector.broadcast %c22_i32 : i32 to vector<8x128xi32>
    %180 = arith.cmpi eq, %0, %179 : vector<8x128xi32>
    %181 = vector.extract_strided_slice %1 {offsets = [22, 0], sizes = [1, 128], strides = [1, 1]} : vector<32x128xf32> to vector<1x128xf32>
    %cst_25 = arith.constant 0.000000e+00 : f32
    %182 = vector.shape_cast %181 : vector<1x128xf32> to vector<1x128xf32>
    %183 = vector.broadcast %182 : vector<1x128xf32> to vector<8x128xf32>
    %184 = vector.broadcast %cst_25 : f32 to vector<8x128xf32>
    %185 = arith.select %180, %183, %184 : vector<8x128xi1>, vector<8x128xf32>
    %186 = arith.addf %178, %185 : vector<8x128xf32>
    %c23_i32 = arith.constant 23 : i32
    %187 = vector.broadcast %c23_i32 : i32 to vector<8x128xi32>
    %188 = arith.cmpi eq, %0, %187 : vector<8x128xi32>
    %189 = vector.extract_strided_slice %1 {offsets = [23, 0], sizes = [1, 128], strides = [1, 1]} : vector<32x128xf32> to vector<1x128xf32>
    %cst_26 = arith.constant 0.000000e+00 : f32
    %190 = vector.shape_cast %189 : vector<1x128xf32> to vector<1x128xf32>
    %191 = vector.broadcast %190 : vector<1x128xf32> to vector<8x128xf32>
    %192 = vector.broadcast %cst_26 : f32 to vector<8x128xf32>
    %193 = arith.select %188, %191, %192 : vector<8x128xi1>, vector<8x128xf32>
    %194 = arith.addf %186, %193 : vector<8x128xf32>
    %c24_i32 = arith.constant 24 : i32
    %195 = vector.broadcast %c24_i32 : i32 to vector<8x128xi32>
    %196 = arith.cmpi eq, %0, %195 : vector<8x128xi32>
    %197 = vector.extract_strided_slice %1 {offsets = [24, 0], sizes = [1, 128], strides = [1, 1]} : vector<32x128xf32> to vector<1x128xf32>
    %cst_27 = arith.constant 0.000000e+00 : f32
    %198 = vector.shape_cast %197 : vector<1x128xf32> to vector<1x128xf32>
    %199 = vector.broadcast %198 : vector<1x128xf32> to vector<8x128xf32>
    %200 = vector.broadcast %cst_27 : f32 to vector<8x128xf32>
    %201 = arith.select %196, %199, %200 : vector<8x128xi1>, vector<8x128xf32>
    %202 = arith.addf %194, %201 : vector<8x128xf32>
    %c25_i32 = arith.constant 25 : i32
    %203 = vector.broadcast %c25_i32 : i32 to vector<8x128xi32>
    %204 = arith.cmpi eq, %0, %203 : vector<8x128xi32>
    %205 = vector.extract_strided_slice %1 {offsets = [25, 0], sizes = [1, 128], strides = [1, 1]} : vector<32x128xf32> to vector<1x128xf32>
    %cst_28 = arith.constant 0.000000e+00 : f32
    %206 = vector.shape_cast %205 : vector<1x128xf32> to vector<1x128xf32>
    %207 = vector.broadcast %206 : vector<1x128xf32> to vector<8x128xf32>
    %208 = vector.broadcast %cst_28 : f32 to vector<8x128xf32>
    %209 = arith.select %204, %207, %208 : vector<8x128xi1>, vector<8x128xf32>
    %210 = arith.addf %202, %209 : vector<8x128xf32>
    %c26_i32 = arith.constant 26 : i32
    %211 = vector.broadcast %c26_i32 : i32 to vector<8x128xi32>
    %212 = arith.cmpi eq, %0, %211 : vector<8x128xi32>
    %213 = vector.extract_strided_slice %1 {offsets = [26, 0], sizes = [1, 128], strides = [1, 1]} : vector<32x128xf32> to vector<1x128xf32>
    %cst_29 = arith.constant 0.000000e+00 : f32
    %214 = vector.shape_cast %213 : vector<1x128xf32> to vector<1x128xf32>
    %215 = vector.broadcast %214 : vector<1x128xf32> to vector<8x128xf32>
    %216 = vector.broadcast %cst_29 : f32 to vector<8x128xf32>
    %217 = arith.select %212, %215, %216 : vector<8x128xi1>, vector<8x128xf32>
    %218 = arith.addf %210, %217 : vector<8x128xf32>
    %c27_i32 = arith.constant 27 : i32
    %219 = vector.broadcast %c27_i32 : i32 to vector<8x128xi32>
    %220 = arith.cmpi eq, %0, %219 : vector<8x128xi32>
    %221 = vector.extract_strided_slice %1 {offsets = [27, 0], sizes = [1, 128], strides = [1, 1]} : vector<32x128xf32> to vector<1x128xf32>
    %cst_30 = arith.constant 0.000000e+00 : f32
    %222 = vector.shape_cast %221 : vector<1x128xf32> to vector<1x128xf32>
    %223 = vector.broadcast %222 : vector<1x128xf32> to vector<8x128xf32>
    %224 = vector.broadcast %cst_30 : f32 to vector<8x128xf32>
    %225 = arith.select %220, %223, %224 : vector<8x128xi1>, vector<8x128xf32>
    %226 = arith.addf %218, %225 : vector<8x128xf32>
    %c28_i32 = arith.constant 28 : i32
    %227 = vector.broadcast %c28_i32 : i32 to vector<8x128xi32>
    %228 = arith.cmpi eq, %0, %227 : vector<8x128xi32>
    %229 = vector.extract_strided_slice %1 {offsets = [28, 0], sizes = [1, 128], strides = [1, 1]} : vector<32x128xf32> to vector<1x128xf32>
    %cst_31 = arith.constant 0.000000e+00 : f32
    %230 = vector.shape_cast %229 : vector<1x128xf32> to vector<1x128xf32>
    %231 = vector.broadcast %230 : vector<1x128xf32> to vector<8x128xf32>
    %232 = vector.broadcast %cst_31 : f32 to vector<8x128xf32>
    %233 = arith.select %228, %231, %232 : vector<8x128xi1>, vector<8x128xf32>
    %234 = arith.addf %226, %233 : vector<8x128xf32>
    %c29_i32 = arith.constant 29 : i32
    %235 = vector.broadcast %c29_i32 : i32 to vector<8x128xi32>
    %236 = arith.cmpi eq, %0, %235 : vector<8x128xi32>
    %237 = vector.extract_strided_slice %1 {offsets = [29, 0], sizes = [1, 128], strides = [1, 1]} : vector<32x128xf32> to vector<1x128xf32>
    %cst_32 = arith.constant 0.000000e+00 : f32
    %238 = vector.shape_cast %237 : vector<1x128xf32> to vector<1x128xf32>
    %239 = vector.broadcast %238 : vector<1x128xf32> to vector<8x128xf32>
    %240 = vector.broadcast %cst_32 : f32 to vector<8x128xf32>
    %241 = arith.select %236, %239, %240 : vector<8x128xi1>, vector<8x128xf32>
    %242 = arith.addf %234, %241 : vector<8x128xf32>
    %c30_i32 = arith.constant 30 : i32
    %243 = vector.broadcast %c30_i32 : i32 to vector<8x128xi32>
    %244 = arith.cmpi eq, %0, %243 : vector<8x128xi32>
    %245 = vector.extract_strided_slice %1 {offsets = [30, 0], sizes = [1, 128], strides = [1, 1]} : vector<32x128xf32> to vector<1x128xf32>
    %cst_33 = arith.constant 0.000000e+00 : f32
    %246 = vector.shape_cast %245 : vector<1x128xf32> to vector<1x128xf32>
    %247 = vector.broadcast %246 : vector<1x128xf32> to vector<8x128xf32>
    %248 = vector.broadcast %cst_33 : f32 to vector<8x128xf32>
    %249 = arith.select %244, %247, %248 : vector<8x128xi1>, vector<8x128xf32>
    %250 = arith.addf %242, %249 : vector<8x128xf32>
    %cst_34 = arith.constant dense<0.000000e+00> : vector<8xf32>
    %251 = vector.multi_reduction <add>, %250, %cst_34 [1] : vector<8x128xf32> to vector<8xf32>
    %252 = vector.shape_cast %251 : vector<8xf32> to vector<8x1xf32>
    %c0_35 = arith.constant 0 : index
    %253 = memref.load %arg3[%c0_35] : memref<1xf32, #tpu.memory_space<smem>>
    %254 = vector.broadcast %253 : f32 to vector<8x1xf32>
    %255 = arith.addf %252, %254 : vector<8x1xf32>
    %256 = arith.negf %255 : vector<8x1xf32>
    %257 = math.exp %256 : vector<8x1xf32>
    %cst_36 = arith.constant 1.000000e+00 : f32
    %258 = vector.broadcast %cst_36 : f32 to vector<8x1xf32>
    %259 = arith.addf %258, %257 : vector<8x1xf32>
    %260 = arith.divf %258, %259 : vector<8x1xf32>
    %c0_37 = arith.constant 0 : index
    %c0_38 = arith.constant 0 : index
    %261 = vector.load %arg4[%c0_37, %c0_38] : memref<8x1xf32, #tpu.memory_space<vmem>>, vector<8x1xf32>
    tpu.vector_store %arg4[%c0_37, %c0_38], %260 {strides = array<i32>} : memref<8x1xf32, #tpu.memory_space<vmem>>, vector<8x1xf32>,
    return
  }
  func.func @transform_0(%arg0: i32) -> (i32, i32) {
    %c0_i32 = arith.constant 0 : i32
    %c0_i32_0 = arith.constant 0 : i32
    return %arg0, %c0_i32 : i32, i32
  }
  func.func @transform_1(%arg0: i32) -> (i32, i32) {
    %c0_i32 = arith.constant 0 : i32
    %c0_i32_0 = arith.constant 0 : i32
    %c0_i32_1 = arith.constant 0 : i32
    return %c0_i32, %c0_i32_0 : i32, i32
  }
  func.func @transform_2(%arg0: i32) -> i32 {
    %c0_i32 = arith.constant 0 : i32
    %c0_i32_0 = arith.constant 0 : i32
    return %c0_i32 : i32
  }
  func.func @transform_3(%arg0: i32) -> (i32, i32) {
    %c0_i32 = arith.constant 0 : i32
    %c0_i32_0 = arith.constant 0 : i32
    return %arg0, %c0_i32 : i32, i32
  }
}

</mosaic_0001>

<llo_original>
// kernel: gbdt_lr_forward.1
$region0: #{gbdt_lr_forward.1}
  #allocation0 [shape = 'u32[]', space=smem, size = 0x4, offset = 0x4, fixed_abs, tag = 'smem constant byte address 0x4 - core index']
  #allocation1 [shape = 'u32[144,128]{1,0:T(1,128)}', space=vmem, size = 0x12000, scoped, tag = 'internal scratch']
  #allocation2 [shape = 'f32[1]{0:T(128)S(6)}', space=smem, size = 0x200, scoped, tag = 'scoped memory for gbdt_lr_forward.1']
  %s0 = inlined_call_operand.vmem [shape: s32[8,128], index: 0, kind: input, shape index: {}]
  %s1 = inlined_call_operand.vmem [shape: f32[32,128], index: 1, kind: input, shape index: {}]
  %s2 = inlined_call_operand.<no memory space> [shape: f32[1], index: 2, kind: input, shape index: {}]
  %s3 = inlined_call_operand.vmem [shape: f32[8,1], index: 3, kind: output, shape index: {}]
  %s4 = sld [smem:[#allocation0]]
  $region22: #{gbdt_lr_forward.1} parent=0
    _
  %s6 = ssub.s32 1, %s4
  %s7 = scalar_select 0, %s6, %s4
  %8 = sst [smem:[#allocation2]] %s2
  // Predicated region
  $region2: #{gbdt_lr_forward.1} parent=0 // pred_check
    _
  $region3: #{gbdt_lr_forward.1} parent=0 // pred_check_branch
    %10 = sbr.rel (0) target = $region5
  $region4: #{gbdt_lr_forward.1} parent=0 // pred_region
    _
  $region5: #{gbdt_lr_forward.1} parent=0 // pred_fallthru
    _
  // Predicated region
  $region6: #{gbdt_lr_forward.1} parent=0 // pred_check
    _
  $region7: #{gbdt_lr_forward.1} parent=0 // pred_check_branch
    %12 = sbr.rel (0) target = $region9
  $region8: #{gbdt_lr_forward.1} parent=0 // pred_region
    _
  $region9: #{gbdt_lr_forward.1} parent=0 // pred_fallthru
    _
  // Predicated region
  $region10: #{gbdt_lr_forward.1} parent=0 // pred_check
    _
  $region11: #{gbdt_lr_forward.1} parent=0 // pred_check_branch
    %14 = sbr.rel (0) target = $region13
  $region12: #{gbdt_lr_forward.1} parent=0 // pred_region
    _
  $region13: #{gbdt_lr_forward.1} parent=0 // pred_fallthru
    _
  %v15 = vld [vmem:[%s0] sm:$0xff]
  %v16 = vld [vmem:[%s1] sm:$0xff]
  %v17 = vld [vmem:[%s1 + $0x8] sm:$0xff]
  %v18 = vld [vmem:[%s1 + $0x10] sm:$0xff]
  %v19 = vld [vmem:[%s1 + $0x18] sm:$0xff]
  %vm20 = vcmp.eq.s32.totalorder %v15, 0
  %v21 = vlaneseq
  %v22 = vshrl.u32 %v21, 7
  %v23 = vsub.s32 0, %v22
  %v24 = vrot.slane %v16, %v23
  %v25 = vsel %vm20, %v24, 0.0
  %v26 = vadd.f32 %v25, 0.0
  %vm27 = vcmp.eq.s32.totalorder %v15, 1
  %v28 = vlaneseq
  %v29 = vshrl.u32 %v28, 7
  %v30 = vsub.s32 1, %v29
  %v31 = vrot.slane %v16, %v30
  %v32 = vsel %vm27, %v31, 0.0
  %v33 = vadd.f32 %v26, %v32
  %vm34 = vcmp.eq.s32.totalorder %v15, 2
  %v35 = vlaneseq
  %v36 = vshrl.u32 %v35, 7
  %v37 = vsub.s32 2, %v36
  %v38 = vrot.slane %v16, %v37
  %v39 = vsel %vm34, %v38, 0.0
  %v40 = vadd.f32 %v33, %v39
  %vm41 = vcmp.eq.s32.totalorder %v15, 3
  %v42 = vlaneseq
  %v43 = vshrl.u32 %v42, 7
  %v44 = vsub.s32 3, %v43
  %v45 = vrot.slane %v16, %v44
  %v46 = vsel %vm41, %v45, 0.0
  %v47 = vadd.f32 %v40, %v46
  %vm48 = vcmp.eq.s32.totalorder %v15, 4
  %v49 = vlaneseq
  %v50 = vshrl.u32 %v49, 7
  %v51 = vsub.s32 4, %v50
  %v52 = vrot.slane %v16, %v51
  %v53 = vsel %vm48, %v52, 0.0
  %v54 = vadd.f32 %v47, %v53
  %vm55 = vcmp.eq.s32.totalorder %v15, 5
  %v56 = vlaneseq
  %v57 = vshrl.u32 %v56, 7
  %v58 = vsub.s32 5, %v57
  %v59 = vrot.slane %v16, %v58
  %v60 = vsel %vm55, %v59, 0.0
  %v61 = vadd.f32 %v54, %v60
  %vm62 = vcmp.eq.s32.totalorder %v15, 6
  %v63 = vlaneseq
  %v64 = vshrl.u32 %v63, 7
  %v65 = vsub.s32 6, %v64
  %v66 = vrot.slane %v16, %v65
  %v67 = vsel %vm62, %v66, 0.0
  %v68 = vadd.f32 %v61, %v67
  %vm69 = vcmp.eq.s32.totalorder %v15, 7
  %v70 = vlaneseq
  %v71 = vshrl.u32 %v70, 7
  %v72 = vsub.s32 7, %v71
  %v73 = vrot.slane %v16, %v72
  %v74 = vsel %vm69, %v73, 0.0
  %v75 = vadd.f32 %v68, %v74
  %vm76 = vcmp.eq.s32.totalorder %v15, 8
  %v77 = vlaneseq
  %v78 = vshrl.u32 %v77, 7
  %v79 = vsub.s32 0, %v78
  %v80 = vrot.slane %v17, %v79
  %v81 = vsel %vm76, %v80, 0.0
  %v82 = vadd.f32 %v75, %v81
  %vm83 = vcmp.eq.s32.totalorder %v15, 9
  %v84 = vlaneseq
  %v85 = vshrl.u32 %v84, 7
  %v86 = vsub.s32 1, %v85
  %v87 = vrot.slane %v17, %v86
  %v88 = vsel %vm83, %v87, 0.0
  %v89 = vadd.f32 %v82, %v88
  %vm90 = vcmp.eq.s32.totalorder %v15, 10
  %v91 = vlaneseq
  %v92 = vshrl.u32 %v91, 7
  %v93 = vsub.s32 2, %v92
  %v94 = vrot.slane %v17, %v93
  %v95 = vsel %vm90, %v94, 0.0
  %v96 = vadd.f32 %v89, %v95
  %vm97 = vcmp.eq.s32.totalorder %v15, 11
  %v98 = vlaneseq
  %v99 = vshrl.u32 %v98, 7
  %v100 = vsub.s32 3, %v99
  %v101 = vrot.slane %v17, %v100
  %v102 = vsel %vm97, %v101, 0.0
  %v103 = vadd.f32 %v96, %v102
  %vm104 = vcmp.eq.s32.totalorder %v15, 12
  %v105 = vlaneseq
  %v106 = vshrl.u32 %v105, 7
  %v107 = vsub.s32 4, %v106
  %v108 = vrot.slane %v17, %v107
  %v109 = vsel %vm104, %v108, 0.0
  %v110 = vadd.f32 %v103, %v109
  %vm111 = vcmp.eq.s32.totalorder %v15, 13
  %v112 = vlaneseq
  %v113 = vshrl.u32 %v112, 7
  %v114 = vsub.s32 5, %v113
  %v115 = vrot.slane %v17, %v114
  %v116 = vsel %vm111, %v115, 0.0
  %v117 = vadd.f32 %v110, %v116
  %vm118 = vcmp.eq.s32.totalorder %v15, 14
  %v119 = vlaneseq
  %v120 = vshrl.u32 %v119, 7
  %v121 = vsub.s32 6, %v120
  %v122 = vrot.slane %v17, %v121
  %v123 = vsel %vm118, %v122, 0.0
  %v124 = vadd.f32 %v117, %v123
  %vm125 = vcmp.eq.s32.totalorder %v15, 15
  %v126 = vlaneseq
  %v127 = vshrl.u32 %v126, 7
  %v128 = vsub.s32 7, %v127
  %v129 = vrot.slane %v17, %v128
  %v130 = vsel %vm125, %v129, 0.0
  %v131 = vadd.f32 %v124, %v130
  %vm132 = vcmp.eq.s32.totalorder %v15, 16
  %v133 = vlaneseq
  %v134 = vshrl.u32 %v133, 7
  %v135 = vsub.s32 0, %v134
  %v136 = vrot.slane %v18, %v135
  %v137 = vsel %vm132, %v136, 0.0
  %v138 = vadd.f32 %v131, %v137
  %vm139 = vcmp.eq.s32.totalorder %v15, 17
  %v140 = vlaneseq
  %v141 = vshrl.u32 %v140, 7
  %v142 = vsub.s32 1, %v141
  %v143 = vrot.slane %v18, %v142
  %v144 = vsel %vm139, %v143, 0.0
  %v145 = vadd.f32 %v138, %v144
  %vm146 = vcmp.eq.s32.totalorder %v15, 18
  %v147 = vlaneseq
  %v148 = vshrl.u32 %v147, 7
  %v149 = vsub.s32 2, %v148
  %v150 = vrot.slane %v18, %v149
  %v151 = vsel %vm146, %v150, 0.0
  %v152 = vadd.f32 %v145, %v151
  %vm153 = vcmp.eq.s32.totalorder %v15, 19
  %v154 = vlaneseq
  %v155 = vshrl.u32 %v154, 7
  %v156 = vsub.s32 3, %v155
  %v157 = vrot.slane %v18, %v156
  %v158 = vsel %vm153, %v157, 0.0
  %v159 = vadd.f32 %v152, %v158
  %vm160 = vcmp.eq.s32.totalorder %v15, 20
  %v161 = vlaneseq
  %v162 = vshrl.u32 %v161, 7
  %v163 = vsub.s32 4, %v162
  %v164 = vrot.slane %v18, %v163
  %v165 = vsel %vm160, %v164, 0.0
  %v166 = vadd.f32 %v159, %v165
  %vm167 = vcmp.eq.s32.totalorder %v15, 21
  %v168 = vlaneseq
  %v169 = vshrl.u32 %v168, 7
  %v170 = vsub.s32 5, %v169
  %v171 = vrot.slane %v18, %v170
  %v172 = vsel %vm167, %v171, 0.0
  %v173 = vadd.f32 %v166, %v172
  %vm174 = vcmp.eq.s32.totalorder %v15, 22
  %v175 = vlaneseq
  %v176 = vshrl.u32 %v175, 7
  %v177 = vsub.s32 6, %v176
  %v178 = vrot.slane %v18, %v177
  %v179 = vsel %vm174, %v178, 0.0
  %v180 = vadd.f32 %v173, %v179
  %vm181 = vcmp.eq.s32.totalorder %v15, 23
  %v182 = vlaneseq
  %v183 = vshrl.u32 %v182, 7
  %v184 = vsub.s32 7, %v183
  %v185 = vrot.slane %v18, %v184
  %v186 = vsel %vm181, %v185, 0.0
  %v187 = vadd.f32 %v180, %v186
  %vm188 = vcmp.eq.s32.totalorder %v15, 24
  %v189 = vlaneseq
  %v190 = vshrl.u32 %v189, 7
  %v191 = vsub.s32 0, %v190
  %v192 = vrot.slane %v19, %v191
  %v193 = vsel %vm188, %v192, 0.0
  %v194 = vadd.f32 %v187, %v193
  %vm195 = vcmp.eq.s32.totalorder %v15, 25
  %v196 = vlaneseq
  %v197 = vshrl.u32 %v196, 7
  %v198 = vsub.s32 1, %v197
  %v199 = vrot.slane %v19, %v198
  %v200 = vsel %vm195, %v199, 0.0
  %v201 = vadd.f32 %v194, %v200
  %vm202 = vcmp.eq.s32.totalorder %v15, 26
  %v203 = vlaneseq
  %v204 = vshrl.u32 %v203, 7
  %v205 = vsub.s32 2, %v204
  %v206 = vrot.slane %v19, %v205
  %v207 = vsel %vm202, %v206, 0.0
  %v208 = vadd.f32 %v201, %v207
  %vm209 = vcmp.eq.s32.totalorder %v15, 27
  %v210 = vlaneseq
  %v211 = vshrl.u32 %v210, 7
  %v212 = vsub.s32 3, %v211
  %v213 = vrot.slane %v19, %v212
  %v214 = vsel %vm209, %v213, 0.0
  %v215 = vadd.f32 %v208, %v214
  %vm216 = vcmp.eq.s32.totalorder %v15, 28
  %v217 = vlaneseq
  %v218 = vshrl.u32 %v217, 7
  %v219 = vsub.s32 4, %v218
  %v220 = vrot.slane %v19, %v219
  %v221 = vsel %vm216, %v220, 0.0
  %v222 = vadd.f32 %v215, %v221
  %vm223 = vcmp.eq.s32.totalorder %v15, 29
  %v224 = vlaneseq
  %v225 = vshrl.u32 %v224, 7
  %v226 = vsub.s32 5, %v225
  %v227 = vrot.slane %v19, %v226
  %v228 = vsel %vm223, %v227, 0.0
  %v229 = vadd.f32 %v222, %v228
  %vm230 = vcmp.eq.s32.totalorder %v15, 30
  %v231 = vlaneseq
  %v232 = vshrl.u32 %v231, 7
  %v233 = vsub.s32 6, %v232
  %v234 = vrot.slane %v19, %v233
  %v235 = vsel %vm230, %v234, 0.0
  %v236 = vadd.f32 %v229, %v235
  %237 = vadd.xlane.f32.xlu0 %v236
  %v238 = vpop.xlane.xlu0 %237
  %s239 = sld [smem:[#allocation2]]
  %v240 = vstv %s239
  %v241 = vadd.f32 %v238, %v240
  %v242 = vxor.u32 %v241, 2147483648
  %v243 = vmul.f32 %v242, 1.442695
  %v244 = vpow.pop %v243
  %v245 = vadd.f32 %v244, 1.0
  %v246 = vrcp.pop %v245
  %v247 = vmul.f32 1.0, %v246
  %vm248 = vcmask 7168
  %249 = vst.msk [vmem:[%s3] sm:$0xff] %vm248, %v247
  // Predicated region
  $region14: #{gbdt_lr_forward.1} parent=0 // pred_check
    _
  $region15: #{gbdt_lr_forward.1} parent=0 // pred_check_branch
    %251 = sbr.rel (0) target = $region17
  $region16: #{gbdt_lr_forward.1} parent=0 // pred_region
    _
  $region17: #{gbdt_lr_forward.1} parent=0 // pred_fallthru
    _
  // Predicated region
  $region18: #{gbdt_lr_forward.1} parent=0 // pred_check
    _
  $region19: #{gbdt_lr_forward.1} parent=0 // pred_check_branch
    %253 = sbr.rel (0) target = $region21
  $region20: #{gbdt_lr_forward.1} parent=0 // pred_region
    _
  $region21: #{gbdt_lr_forward.1} parent=0 // pred_fallthru
    _

</llo_original>
